<compile_context>
chip_gen: v7x
topology: tpu7x:2x2x1
jax: 0.10.0
libtpu: 0.0.40
codegen_flags: <defaults>
</compile_context>

<pallas_src>
import functools

import jax
import jax.numpy as jnp
from jax.experimental import pallas as pl
from jax.experimental.pallas import tpu as pltpu

LANE = 128  # pad ONLY the final output feature dim to a multiple of this


def round_up(n, m):
    return ((n + m - 1) // m) * m


def _dual_tensorcore():
    """True on dual-TensorCore chips (v7x); safe fallback elsewhere/interpret."""
    try:
        kind = jax.devices()[0].device_kind.lower()
        return ("v7" in kind) or ("7x" in kind)
    except Exception:
        return False


def _pick_tile(batch, dual_core):
    if dual_core and batch > 128:
        return 128            # >=2 tiles so both v7x TensorCores get work
    if batch <= 1024:
        return batch          # single grid step on single-TC chips (v5e/v6e)
    return 512                # cap tile size for very large batches


# ---------------------------------------------------------------------------
# Kernel factory: builds a fused MLP kernel from the same `cfg` convention as
# the PyTorch module ('ReLU' / 'Softmax' / int -> Linear(out=int)).
# Only the final linear's output dim may be lane-padded; the softmax masks the
# padded logit lanes using the true feature width (static from cfg).
# ---------------------------------------------------------------------------
def make_mlp_kernel(cfg, input_size):
    ops = []   # ("relu", None) / ("softmax", true_dim) / ("linear", param_idx)
    dim = input_size
    p = 0
    for v in cfg:
        if v == "ReLU":
            ops.append(("relu", None))
        elif v == "Softmax":
            ops.append(("softmax", dim))
        else:
            ops.append(("linear", p))
            p += 2
            dim = v
    n_params = p

    def kernel(*refs):
        # refs = (x_ref, w0_ref, b0_ref, w1_ref, b1_ref, ..., out_ref)
        x_ref = refs[0]
        out_ref = refs[-1]
        param_refs = refs[1:-1]

        h = x_ref[...]  # (TILE_B, in_dim) bf16
        for op, arg in ops:
            if op == "relu":
                h = jnp.maximum(h, 0.0)
            elif op == "softmax":
                # torch.nn.Softmax(dim=1) over the TRUE feature axis.
                true_dim = arg
                if true_dim < h.shape[1]:
                    col = jax.lax.broadcasted_iota(jnp.int32, h.shape, 1)
                    h = jnp.where(col < true_dim, h, -1e30)  # mask padded lanes
                m = jnp.max(h, axis=1, keepdims=True)
                e = jnp.exp(h - m)                           # padded lanes -> 0
                s = jnp.sum(e, axis=1, keepdims=True)
                h = e / s        # exact divide: rows sum to 1 (feeds A2C log-probs)
            else:
                w = param_refs[arg][...]        # (in, out[_padded])  bf16
                b = param_refs[arg + 1][...]    # (1, out[_padded])   f32
                # bf16 MXU matmul, f32 accumulate; bias add stays f32 on the VPU.
                h = jnp.dot(h.astype(w.dtype), w,
                            preferred_element_type=jnp.float32) + b
        out_ref[...] = h.astype(out_ref.dtype)

    return kernel, n_params


# ---------------------------------------------------------------------------
# Parameter init (deterministic, in-script).  Mirrors nn.Linear shapes:
# torch weight (out, in) -> stored transposed (in, out) here; bias (out,).
#   params_ref    : true-shape f32 params (weights round-tripped through bf16)
#                   for the pure-JAX reference.
#   params_kernel : bf16 weights / f32 biases; ONLY the final layer's out dim is
#                   zero-padded to a multiple of 128 for a lane-dense out store.
# ---------------------------------------------------------------------------
def init_params(key, input_size, cfg):
    linear_outs = [v for v in cfg if isinstance(v, int)]
    n_linear = len(linear_outs)
    params_ref, params_kernel = [], []
    in_dim = input_size
    li = 0
    for v in cfg:
        if not isinstance(v, int):
            continue
        key, wkey = jax.random.split(key)
        bound = float(jnp.sqrt(6.0 / (in_dim + v)))      # Xavier-uniform bound
        w = jax.random.uniform(wkey, (in_dim, v), jnp.float32, -bound, bound)
        b = jnp.full((1, v), 0.01, jnp.float32)

        is_final = (li == n_linear - 1)
        out_pad = round_up(v, LANE) if is_final else v
        wp = jnp.pad(w, ((0, 0), (0, out_pad - v))).astype(jnp.bfloat16)
        bp = jnp.pad(b, ((0, 0), (0, out_pad - v)))      # bias stays f32
        params_kernel += [wp, bp]
        params_ref += [wp[:, :v].astype(jnp.float32), b]

        in_dim = v
        li += 1
    return params_ref, params_kernel, in_dim


# ---------------------------------------------------------------------------
# Wrapper: one pallas_call, grid over batch tiles; weights VMEM-resident via
# constant index_maps; lane-dense 128-wide output sliced back afterwards.
# ---------------------------------------------------------------------------
@functools.partial(jax.jit, static_argnames=("cfg", "out_dim", "tile_b"))
def _forward_jit(x, params_kernel, *, cfg, out_dim, tile_b):
    B, in_dim = x.shape
    pad_out = round_up(out_dim, LANE)
    n_tiles = pl.cdiv(B, tile_b)
    n_rows = n_tiles * tile_b

    xb = x.astype(jnp.bfloat16)   # halves x DMA; matmul accumulates in f32

    kernel, n_params = make_mlp_kernel(cfg, in_dim)
    assert n_params == len(params_kernel)

    in_specs = [pl.BlockSpec((tile_b, in_dim), lambda i: (i, 0))]
    # Constant index_map -> same block every grid step: DMA'd once, reused.
    for p in params_kernel:
        in_specs.append(pl.BlockSpec(p.shape, lambda i: (0, 0)))
    out_spec = pl.BlockSpec((tile_b, pad_out), lambda i: (i, 0))

    # Advisory cost estimate so XLA can pack/overlap this tiny custom call.
    flops = 0
    transcendentals = 0
    d = in_dim
    for v in cfg:
        if v == "ReLU":
            pass
        elif v == "Softmax":
            transcendentals += B * d
        else:
            flops += 2 * B * d * v
            d = v
    bytes_accessed = int(
        xb.size * xb.dtype.itemsize
        + sum(int(p.size) * p.dtype.itemsize for p in params_kernel)
        + n_rows * pad_out * 4)
    cost = pl.CostEstimate(flops=int(flops),
                           transcendentals=int(transcendentals),
                           bytes_accessed=bytes_accessed)

    out_padded = pl.pallas_call(
        kernel,
        out_shape=jax.ShapeDtypeStruct((n_rows, pad_out), jnp.float32),
        grid=(n_tiles,),
        in_specs=in_specs,
        out_specs=out_spec,
        compiler_params=pltpu.CompilerParams(
            dimension_semantics=("parallel",)),  # batch tiles -> both TCs on v7x
        cost_estimate=cost,
    )(xb, *params_kernel)
    return out_padded[:B, :out_dim]


def net_forward(x, params_kernel, *, cfg, out_dim):
    tile_b = _pick_tile(x.shape[0], _dual_tensorcore())
    return _forward_jit(x, params_kernel, cfg=cfg, out_dim=out_dim, tile_b=tile_b)


# Pure-JAX reference matching the kernel's precision policy (bf16 matmul
# operands, f32 accumulation / bias / softmax).
def net_forward_ref(x, params_ref, cfg):
    h = x
    p = 0
    for v in cfg:
        if v == "ReLU":
            h = jnp.maximum(h, 0.0)
        elif v == "Softmax":
            h = jax.nn.softmax(h, axis=1)
        else:
            hb = h.astype(jnp.bfloat16).astype(jnp.float32)
            h = hb @ params_ref[p] + params_ref[p + 1]
            p += 2
    return h


if __name__ == "__main__":
    # Typical A2C actor head: two hidden ReLU layers + action softmax.
    INPUT_SIZE = 32
    CFG = (64, "ReLU", 64, "ReLU", 8, "Softmax")
    BATCH = 256

    key = jax.random.PRNGKey(0)
    key, xkey = jax.random.split(key)
    x = jax.random.normal(xkey, (BATCH, INPUT_SIZE), jnp.float32)

    params_ref, params_kernel, out_dim = init_params(key, INPUT_SIZE, CFG)

    out = net_forward(x, params_kernel, cfg=CFG, out_dim=out_dim)
    out = jax.block_until_ready(out)

    ref = net_forward_ref(x, params_ref, CFG)
    assert out.shape == (BATCH, out_dim)
    assert jnp.allclose(out, ref, atol=1e-3, rtol=1e-3)
    # Exact divide in the softmax -> rows sum to 1 to f32 rounding.
    assert jnp.allclose(jnp.sum(out, axis=1), jnp.ones((BATCH,)), atol=1e-4)

    print("KERNEL_OK")
</pallas_src>

<mosaic_0001>
module attributes {stable_mosaic.version = 11 : i64} {
  func.func @kernel(%arg0: i32, %arg1: memref<256x32xbf16, #tpu.memory_space<vmem>>, %arg2: memref<32x64xbf16, #tpu.memory_space<vmem>>, %arg3: memref<1x64xf32, #tpu.memory_space<vmem>>, %arg4: memref<64x64xbf16, #tpu.memory_space<vmem>>, %arg5: memref<1x64xf32, #tpu.memory_space<vmem>>, %arg6: memref<64x128xbf16, #tpu.memory_space<vmem>>, %arg7: memref<1x128xf32, #tpu.memory_space<vmem>>, %arg8: memref<256x128xf32, #tpu.memory_space<vmem>>) attributes {dimension_semantics = [#tpu.dimension_semantics<parallel>], iteration_bounds = array<i64: 1>, scalar_prefetch = 0 : i64, scratch_operands = 0 : i64, tpu.core_type = #tpu.core_type<tc>, window_params = [{transform_indices = @transform_0, window_bounds = array<i64: 256, 32>}, {pipeline_mode = #tpu.pipeline_mode<synchronous>, transform_indices = @transform_1, window_bounds = array<i64: 32, 64>}, {pipeline_mode = #tpu.pipeline_mode<synchronous>, transform_indices = @transform_2, window_bounds = array<i64: 1, 64>}, {pipeline_mode = #tpu.pipeline_mode<synchronous>, transform_indices = @transform_3, window_bounds = array<i64: 64, 64>}, {pipeline_mode = #tpu.pipeline_mode<synchronous>, transform_indices = @transform_4, window_bounds = array<i64: 1, 64>}, {pipeline_mode = #tpu.pipeline_mode<synchronous>, transform_indices = @transform_5, window_bounds = array<i64: 64, 128>}, {pipeline_mode = #tpu.pipeline_mode<synchronous>, transform_indices = @transform_6, window_bounds = array<i64: 1, 128>}, {transform_indices = @transform_7, window_bounds = array<i64: 256, 128>}]} {
    %c0 = arith.constant 0 : index
    %c0_0 = arith.constant 0 : index
    %0 = vector.load %arg1[%c0, %c0_0] : memref<256x32xbf16, #tpu.memory_space<vmem>>, vector<256x32xbf16>
    %c0_1 = arith.constant 0 : index
    %c0_2 = arith.constant 0 : index
    %1 = vector.load %arg2[%c0_1, %c0_2] : memref<32x64xbf16, #tpu.memory_space<vmem>>, vector<32x64xbf16>
    %c0_3 = arith.constant 0 : index
    %c0_4 = arith.constant 0 : index
    %2 = vector.load %arg3[%c0_3, %c0_4] : memref<1x64xf32, #tpu.memory_space<vmem>>, vector<1x64xf32>
    %cst = arith.constant dense<0.000000e+00> : vector<256x64xf32>
    %3 = tpu.matmul %0, %1, %cst {dimension_numbers = #tpu.dot_dimension_numbers<[1], [0], [0], [1], [0, 0, 1, 1], [], []>} : vector<256x32xbf16>, vector<32x64xbf16>, vector<256x64xf32> -> vector<256x64xf32>
    %4 = vector.broadcast %2 : vector<1x64xf32> to vector<256x64xf32>
    %5 = arith.addf %3, %4 : vector<256x64xf32>
    %cst_5 = arith.constant 0.000000e+00 : f32
    %6 = vector.broadcast %cst_5 : f32 to vector<256x64xf32>
    %7 = arith.maximumf %5, %6 : vector<256x64xf32>
    %c0_6 = arith.constant 0 : index
    %c0_7 = arith.constant 0 : index
    %8 = vector.load %arg4[%c0_6, %c0_7] : memref<64x64xbf16, #tpu.memory_space<vmem>>, vector<64x64xbf16>
    %c0_8 = arith.constant 0 : index
    %c0_9 = arith.constant 0 : index
    %9 = vector.load %arg5[%c0_8, %c0_9] : memref<1x64xf32, #tpu.memory_space<vmem>>, vector<1x64xf32>
    %10 = arith.truncf %7 : vector<256x64xf32> to vector<256x64xbf16>
    %cst_10 = arith.constant dense<0.000000e+00> : vector<256x64xf32>
    %11 = tpu.matmul %10, %8, %cst_10 {dimension_numbers = #tpu.dot_dimension_numbers<[1], [0], [0], [1], [0, 0, 1, 1], [], []>} : vector<256x64xbf16>, vector<64x64xbf16>, vector<256x64xf32> -> vector<256x64xf32>
    %12 = vector.broadcast %9 : vector<1x64xf32> to vector<256x64xf32>
    %13 = arith.addf %11, %12 : vector<256x64xf32>
    %cst_11 = arith.constant 0.000000e+00 : f32
    %14 = vector.broadcast %cst_11 : f32 to vector<256x64xf32>
    %15 = arith.maximumf %13, %14 : vector<256x64xf32>
    %c0_12 = arith.constant 0 : index
    %c0_13 = arith.constant 0 : index
    %16 = vector.load %arg6[%c0_12, %c0_13] : memref<64x128xbf16, #tpu.memory_space<vmem>>, vector<64x128xbf16>
    %c0_14 = arith.constant 0 : index
    %c0_15 = arith.constant 0 : index
    %17 = vector.load %arg7[%c0_14, %c0_15] : memref<1x128xf32, #tpu.memory_space<vmem>>, vector<1x128xf32>
    %18 = arith.truncf %15 : vector<256x64xf32> to vector<256x64xbf16>
    %cst_16 = arith.constant dense<0.000000e+00> : vector<256x128xf32>
    %19 = tpu.matmul %18, %16, %cst_16 {dimension_numbers = #tpu.dot_dimension_numbers<[1], [0], [0], [1], [0, 0, 1, 1], [], []>} : vector<256x64xbf16>, vector<64x128xbf16>, vector<256x128xf32> -> vector<256x128xf32>
    %20 = vector.broadcast %17 : vector<1x128xf32> to vector<256x128xf32>
    %21 = arith.addf %19, %20 : vector<256x128xf32>
    %22 = tpu.iota {dimensions = array<i32: 1>} : vector<256x128xi32>
    %c8_i32 = arith.constant 8 : i32
    %23 = vector.broadcast %c8_i32 : i32 to vector<256x128xi32>
    %24 = arith.cmpi slt, %22, %23 : vector<256x128xi32>
    %cst_17 = arith.constant -1.000000e+30 : f32
    %25 = vector.broadcast %cst_17 : f32 to vector<256x128xf32>
    %26 = arith.select %24, %21, %25 : vector<256x128xi1>, vector<256x128xf32>
    %cst_18 = arith.constant dense<0xFF800000> : vector<256xf32>
    %27 = vector.multi_reduction <maximumf>, %26, %cst_18 [1] : vector<256x128xf32> to vector<256xf32>
    %28 = vector.shape_cast %27 : vector<256xf32> to vector<256x1xf32>
    %29 = vector.broadcast %28 : vector<256x1xf32> to vector<256x128xf32>
    %30 = arith.subf %26, %29 : vector<256x128xf32>
    %31 = math.exp %30 : vector<256x128xf32>
    %cst_19 = arith.constant dense<0.000000e+00> : vector<256xf32>
    %32 = vector.multi_reduction <add>, %31, %cst_19 [1] : vector<256x128xf32> to vector<256xf32>
    %33 = vector.shape_cast %32 : vector<256xf32> to vector<256x1xf32>
    %34 = vector.broadcast %33 : vector<256x1xf32> to vector<256x128xf32>
    %35 = arith.divf %31, %34 : vector<256x128xf32>
    %c0_20 = arith.constant 0 : index
    %c0_21 = arith.constant 0 : index
    %36 = vector.load %arg8[%c0_20, %c0_21] : memref<256x128xf32, #tpu.memory_space<vmem>>, vector<256x128xf32>
    tpu.vector_store %arg8[%c0_20, %c0_21], %35 {strides = array<i32>} : memref<256x128xf32, #tpu.memory_space<vmem>>, vector<256x128xf32>,
    return
  }
  func.func @transform_0(%arg0: i32) -> (i32, i32) {
    %c0_i32 = arith.constant 0 : i32
    %c0_i32_0 = arith.constant 0 : i32
    return %arg0, %c0_i32 : i32, i32
  }
  func.func @transform_1(%arg0: i32) -> (i32, i32) {
    %c0_i32 = arith.constant 0 : i32
    %c0_i32_0 = arith.constant 0 : i32
    %c0_i32_1 = arith.constant 0 : i32
    return %c0_i32, %c0_i32_0 : i32, i32
  }
  func.func @transform_2(%arg0: i32) -> (i32, i32) {
    %c0_i32 = arith.constant 0 : i32
    %c0_i32_0 = arith.constant 0 : i32
    %c0_i32_1 = arith.constant 0 : i32
    return %c0_i32, %c0_i32_0 : i32, i32
  }
  func.func @transform_3(%arg0: i32) -> (i32, i32) {
    %c0_i32 = arith.constant 0 : i32
    %c0_i32_0 = arith.constant 0 : i32
    %c0_i32_1 = arith.constant 0 : i32
    return %c0_i32, %c0_i32_0 : i32, i32
  }
  func.func @transform_4(%arg0: i32) -> (i32, i32) {
    %c0_i32 = arith.constant 0 : i32
    %c0_i32_0 = arith.constant 0 : i32
    %c0_i32_1 = arith.constant 0 : i32
    return %c0_i32, %c0_i32_0 : i32, i32
  }
  func.func @transform_5(%arg0: i32) -> (i32, i32) {
    %c0_i32 = arith.constant 0 : i32
    %c0_i32_0 = arith.constant 0 : i32
    %c0_i32_1 = arith.constant 0 : i32
    return %c0_i32, %c0_i32_0 : i32, i32
  }
  func.func @transform_6(%arg0: i32) -> (i32, i32) {
    %c0_i32 = arith.constant 0 : i32
    %c0_i32_0 = arith.constant 0 : i32
    %c0_i32_1 = arith.constant 0 : i32
    return %c0_i32, %c0_i32_0 : i32, i32
  }
  func.func @transform_7(%arg0: i32) -> (i32, i32) {
    %c0_i32 = arith.constant 0 : i32
    %c0_i32_0 = arith.constant 0 : i32
    return %arg0, %c0_i32 : i32, i32
  }
}

</mosaic_0001>

<llo_original>
// kernel: _forward_jit.1
$region0: #{_forward_jit.1}
  #allocation0 [shape = 'u32[]', space=smem, size = 0x4, offset = 0x4, fixed_abs, tag = 'smem constant byte address 0x4 - core index']
  #allocation1 [shape = 'u32[144,128]{1,0:T(1,128)}', space=vmem, size = 0x12000, scoped, tag = 'internal scratch']
  %s0 = inlined_call_operand.vmem [shape: bf16[256,32], index: 0, kind: input, shape index: {}]
  %s1 = inlined_call_operand.vmem [shape: bf16[32,64], index: 1, kind: input, shape index: {}]
  %s2 = inlined_call_operand.vmem [shape: f32[1,64], index: 2, kind: input, shape index: {}]
  %s3 = inlined_call_operand.vmem [shape: bf16[64,64], index: 3, kind: input, shape index: {}]
  %s4 = inlined_call_operand.vmem [shape: f32[1,64], index: 4, kind: input, shape index: {}]
  %s5 = inlined_call_operand.vmem [shape: bf16[64,128], index: 5, kind: input, shape index: {}]
  %s6 = inlined_call_operand.vmem [shape: f32[1,128], index: 6, kind: input, shape index: {}]
  %s7 = inlined_call_operand.vmem [shape: f32[256,128], index: 7, kind: output, shape index: {}]
  %s8 = sld [smem:[#allocation0]]
  $region38: #{_forward_jit.1} parent=0
    _
  %s10 = ssub.s32 1, %s8
  %s11 = scalar_select 0, %s10, %s8
  // Predicated region
  $region2: #{_forward_jit.1} parent=0 // pred_check
    _
  $region3: #{_forward_jit.1} parent=0 // pred_check_branch
    %13 = sbr.rel (0) target = $region5
  $region4: #{_forward_jit.1} parent=0 // pred_region
    _
  $region5: #{_forward_jit.1} parent=0 // pred_fallthru
    _
  // Predicated region
  $region6: #{_forward_jit.1} parent=0 // pred_check
    _
  $region7: #{_forward_jit.1} parent=0 // pred_check_branch
    %15 = sbr.rel (0) target = $region9
  $region8: #{_forward_jit.1} parent=0 // pred_region
    _
  $region9: #{_forward_jit.1} parent=0 // pred_fallthru
    _
  // Predicated region
  $region10: #{_forward_jit.1} parent=0 // pred_check
    _
  $region11: #{_forward_jit.1} parent=0 // pred_check_branch
    %17 = sbr.rel (0) target = $region13
  $region12: #{_forward_jit.1} parent=0 // pred_region
    _
  $region13: #{_forward_jit.1} parent=0 // pred_fallthru
    _
  // Predicated region
  $region14: #{_forward_jit.1} parent=0 // pred_check
    _
  $region15: #{_forward_jit.1} parent=0 // pred_check_branch
    %19 = sbr.rel (0) target = $region17
  $region16: #{_forward_jit.1} parent=0 // pred_region
    _
  $region17: #{_forward_jit.1} parent=0 // pred_fallthru
    _
  // Predicated region
  $region18: #{_forward_jit.1} parent=0 // pred_check
    _
  $region19: #{_forward_jit.1} parent=0 // pred_check_branch
    %21 = sbr.rel (0) target = $region21
  $region20: #{_forward_jit.1} parent=0 // pred_region
    _
  $region21: #{_forward_jit.1} parent=0 // pred_fallthru
    _
  // Predicated region
  $region22: #{_forward_jit.1} parent=0 // pred_check
    _
  $region23: #{_forward_jit.1} parent=0 // pred_check_branch
    %23 = sbr.rel (0) target = $region25
  $region24: #{_forward_jit.1} parent=0 // pred_region
    _
  $region25: #{_forward_jit.1} parent=0 // pred_fallthru
    _
  // Predicated region
  $region26: #{_forward_jit.1} parent=0 // pred_check
    _
  $region27: #{_forward_jit.1} parent=0 // pred_check_branch
    %25 = sbr.rel (0) target = $region29
  $region28: #{_forward_jit.1} parent=0 // pred_region
    _
  $region29: #{_forward_jit.1} parent=0 // pred_fallthru
    _
  %v27 = vld [vmem:[%s0] sm:$0xf]
  %v28 = vld [vmem:[%s0 + $0x4] sm:$0xf]
  %v29 = vld [vmem:[%s0 + $0x8] sm:$0xf]
  %v30 = vld [vmem:[%s0 + $0xc] sm:$0xf]
  %v31 = vld [vmem:[%s0 + $0x10] sm:$0xf]
  %v32 = vld [vmem:[%s0 + $0x14] sm:$0xf]
  %v33 = vld [vmem:[%s0 + $0x18] sm:$0xf]
  %v34 = vld [vmem:[%s0 + $0x1c] sm:$0xf]
  %v35 = vld [vmem:[%s0 + $0x20] sm:$0xf]
  %v36 = vld [vmem:[%s0 + $0x24] sm:$0xf]
  %v37 = vld [vmem:[%s0 + $0x28] sm:$0xf]
  %v38 = vld [vmem:[%s0 + $0x2c] sm:$0xf]
  %v39 = vld [vmem:[%s0 + $0x30] sm:$0xf]
  %v40 = vld [vmem:[%s0 + $0x34] sm:$0xf]
  %v41 = vld [vmem:[%s0 + $0x38] sm:$0xf]
  %v42 = vld [vmem:[%s0 + $0x3c] sm:$0xf]
  %v43 = vld [vmem:[%s0 + $0x40] sm:$0xf]
  %v44 = vld [vmem:[%s0 + $0x44] sm:$0xf]
  %v45 = vld [vmem:[%s0 + $0x48] sm:$0xf]
  %v46 = vld [vmem:[%s0 + $0x4c] sm:$0xf]
  %v47 = vld [vmem:[%s0 + $0x50] sm:$0xf]
  %v48 = vld [vmem:[%s0 + $0x54] sm:$0xf]
  %v49 = vld [vmem:[%s0 + $0x58] sm:$0xf]
  %v50 = vld [vmem:[%s0 + $0x5c] sm:$0xf]
  %v51 = vld [vmem:[%s0 + $0x60] sm:$0xf]
  %v52 = vld [vmem:[%s0 + $0x64] sm:$0xf]
  %v53 = vld [vmem:[%s0 + $0x68] sm:$0xf]
  %v54 = vld [vmem:[%s0 + $0x6c] sm:$0xf]
  %v55 = vld [vmem:[%s0 + $0x70] sm:$0xf]
  %v56 = vld [vmem:[%s0 + $0x74] sm:$0xf]
  %v57 = vld [vmem:[%s0 + $0x78] sm:$0xf]
  %v58 = vld [vmem:[%s0 + $0x7c] sm:$0xf]
  %v59 = vld [vmem:[%s1] sm:$0xf]
  %v60 = vld [vmem:[%s1 + $0x4] sm:$0xf]
  %v61 = vld [vmem:[%s1 + $0x8] sm:$0xf]
  %v62 = vld [vmem:[%s1 + $0xc] sm:$0xf]
  %v63 = vld [vmem:[%s2] sm:$0x1]
  %v65 = vlaneseq
  %v66 = vshrl.u32 %v65, 7
  %v67 = vsub.s32 0, %v66
  %v68 = vrot.slane %v63, %v67
  %v102 = vunpack.c.l.b16 %v27
  %v103 = vunpack.c.l.b16 %v28
  %v104 = vunpack.c.l.b16 %v29
  %v105 = vunpack.c.l.b16 %v30
  %v106 = vunpack.c.l.b16 %v31
  %v107 = vunpack.c.l.b16 %v32
  %v108 = vunpack.c.l.b16 %v33
  %v109 = vunpack.c.l.b16 %v34
  %v110 = vunpack.c.l.b16 %v35
  %v111 = vunpack.c.l.b16 %v36
  %v112 = vunpack.c.l.b16 %v37
  %v113 = vunpack.c.l.b16 %v38
  %v114 = vunpack.c.l.b16 %v39
  %v115 = vunpack.c.l.b16 %v40
  %v116 = vunpack.c.l.b16 %v41
  %v117 = vunpack.c.l.b16 %v42
  %v118 = vunpack.c.l.b16 %v43
  %v119 = vunpack.c.l.b16 %v44
  %v120 = vunpack.c.l.b16 %v45
  %v121 = vunpack.c.l.b16 %v46
  %v122 = vunpack.c.l.b16 %v47
  %v123 = vunpack.c.l.b16 %v48
  %v124 = vunpack.c.l.b16 %v49
  %v125 = vunpack.c.l.b16 %v50
  %v126 = vunpack.c.l.b16 %v51
  %v127 = vunpack.c.l.b16 %v52
  %v128 = vunpack.c.l.b16 %v53
  %v129 = vunpack.c.l.b16 %v54
  %v130 = vunpack.c.l.b16 %v55
  %v131 = vunpack.c.l.b16 %v56
  %v132 = vunpack.c.l.b16 %v57
  %v133 = vunpack.c.l.b16 %v58
  %v134 = vpack.c.b16 %v103, %v102
  %v135 = vpack.c.b16 %v105, %v104
  %v136 = vpack.c.b16 %v107, %v106
  %v137 = vpack.c.b16 %v109, %v108
  %v138 = vpack.c.b16 %v111, %v110
  %v139 = vpack.c.b16 %v113, %v112
  %v140 = vpack.c.b16 %v115, %v114
  %v141 = vpack.c.b16 %v117, %v116
  %v142 = vpack.c.b16 %v119, %v118
  %v143 = vpack.c.b16 %v121, %v120
  %v144 = vpack.c.b16 %v123, %v122
  %v145 = vpack.c.b16 %v125, %v124
  %v146 = vpack.c.b16 %v127, %v126
  %v147 = vpack.c.b16 %v129, %v128
  %v148 = vpack.c.b16 %v131, %v130
  %v149 = vpack.c.b16 %v133, %v132
  %v154 = vunpack.c.l.b16 %v59
  %v155 = vunpack.c.l.b16 %v60
  %v156 = vunpack.c.l.b16 %v61
  %v157 = vunpack.c.l.b16 %v62
  %v158 = vpack.c.b16 %v155, %v154
  %v159 = vpack.c.b16 %v157, %v156
  %vm162 = vcmask 261120
  %v164 = vsel %vm162, %v134, 0
  %v167 = vsel %vm162, %v135, 0
  %v170 = vsel %vm162, %v136, 0
  %v173 = vsel %vm162, %v137, 0
  %v176 = vsel %vm162, %v138, 0
  %v179 = vsel %vm162, %v139, 0
  %v182 = vsel %vm162, %v140, 0
  %v185 = vsel %vm162, %v141, 0
  %v188 = vsel %vm162, %v142, 0
  %v191 = vsel %vm162, %v143, 0
  %v194 = vsel %vm162, %v144, 0
  %v197 = vsel %vm162, %v145, 0
  %v200 = vsel %vm162, %v146, 0
  %v203 = vsel %vm162, %v147, 0
  %v206 = vsel %vm162, %v148, 0
  %v209 = vsel %vm162, %v149, 0
  %211 = vmatprep.subr.bf16.mxu0 0
  %212 = vmatpush1.bf16.msra.mxu0 %v158
  %213 = vmatprep.subr.bf16.mxu0 0
  %214 = vmatpush1.bf16.msra.mxu0 %v159
  %215 = vmatprep.subr.bf16.mxu0 0
  %216 = vmatpush1.bf16.msra.mxu0 0
  %217 = vmatprep.subr.bf16.mxu0 0
  %218 = vmatpush1.bf16.msra.mxu0 0
  %219 = vmatprep.subr.bf16.mxu0 0
  %220 = vmatpush1.bf16.msra.mxu0 0
  %221 = vmatprep.subr.bf16.mxu0 0
  %222 = vmatpush1.bf16.msra.mxu0 0
  %223 = vmatprep.subr.bf16.mxu0 0
  %224 = vmatpush1.bf16.msra.mxu0 0
  %225 = vmatprep.subr.bf16.mxu0 0
  %226 = vmatpush1.bf16.msra.mxu0 0
  %227 = vmatprep.subr.bf16.mxu0 0
  %228 = vmatpush1.bf16.msra.mxu0 0
  %229 = vmatprep.subr.bf16.mxu0 0
  %230 = vmatpush1.bf16.msra.mxu0 0
  %231 = vmatprep.subr.bf16.mxu0 0
  %232 = vmatpush1.bf16.msra.mxu0 0
  %233 = vmatprep.subr.bf16.mxu0 0
  %234 = vmatpush1.bf16.msra.mxu0 0
  %235 = vmatprep.subr.bf16.mxu0 0
  %236 = vmatpush1.bf16.msra.mxu0 0
  %237 = vmatprep.subr.bf16.mxu0 0
  %238 = vmatpush1.bf16.msra.mxu0 0
  %239 = vmatprep.subr.bf16.mxu0 0
  %240 = vmatpush1.bf16.msra.mxu0 0
  %241 = vmatprep.subr.bf16.mxu0 0
  %242 = vmatpush1.bf16.msra.mxu0 0
  %243 = vmatprep.mubr.bf16.mxu0 0
  %244 = vmatmul.mubr.bf16.gmra.mrb[0].mxu0 %v164
  %v245 = vpop.f32.mrb[0].mxu0
  %v246 = vadd.f32 %v68, %v245
  %v247 = vpop.f32.mrb[0].mxu0
  %v248 = vpop.f32.mrb[0].mxu0
  %v249 = vadd.f32 %v68, %v248
  %v250 = vpop.f32.mrb[0].mxu0
  %251 = vmatprep.mubr.bf16.mxu0 0
  %252 = vmatmul.mubr.bf16.gmra.mrb[0].mxu0 %v167
  %v253 = vpop.f32.mrb[0].mxu0
  %v254 = vadd.f32 %v68, %v253
  %v255 = vpop.f32.mrb[0].mxu0
  %v256 = vpop.f32.mrb[0].mxu0
  %v257 = vadd.f32 %v68, %v256
  %v258 = vpop.f32.mrb[0].mxu0
  %259 = vmatprep.mubr.bf16.mxu0 0
  %260 = vmatmul.mubr.bf16.gmra.mrb[0].mxu0 %v170
  %v261 = vpop.f32.mrb[0].mxu0
  %v262 = vadd.f32 %v68, %v261
  %v263 = vpop.f32.mrb[0].mxu0
  %v264 = vpop.f32.mrb[0].mxu0
  %v265 = vadd.f32 %v68, %v264
  %v266 = vpop.f32.mrb[0].mxu0
  %267 = vmatprep.mubr.bf16.mxu0 0
  %268 = vmatmul.mubr.bf16.gmra.mrb[0].mxu0 %v173
  %v269 = vpop.f32.mrb[0].mxu0
  %v270 = vadd.f32 %v68, %v269
  %v271 = vpop.f32.mrb[0].mxu0
  %v272 = vpop.f32.mrb[0].mxu0
  %v273 = vadd.f32 %v68, %v272
  %v274 = vpop.f32.mrb[0].mxu0
  %275 = vmatprep.mubr.bf16.mxu0 0
  %276 = vmatmul.mubr.bf16.gmra.mrb[0].mxu0 %v176
  %v277 = vpop.f32.mrb[0].mxu0
  %v278 = vadd.f32 %v68, %v277
  %v279 = vpop.f32.mrb[0].mxu0
  %v280 = vpop.f32.mrb[0].mxu0
  %v281 = vadd.f32 %v68, %v280
  %v282 = vpop.f32.mrb[0].mxu0
  %283 = vmatprep.mubr.bf16.mxu0 0
  %284 = vmatmul.mubr.bf16.gmra.mrb[0].mxu0 %v179
  %v285 = vpop.f32.mrb[0].mxu0
  %v286 = vadd.f32 %v68, %v285
  %v287 = vpop.f32.mrb[0].mxu0
  %v288 = vpop.f32.mrb[0].mxu0
  %v289 = vadd.f32 %v68, %v288
  %v290 = vpop.f32.mrb[0].mxu0
  %291 = vmatprep.mubr.bf16.mxu0 0
  %292 = vmatmul.mubr.bf16.gmra.mrb[0].mxu0 %v182
  %v293 = vpop.f32.mrb[0].mxu0
  %v294 = vadd.f32 %v68, %v293
  %v295 = vpop.f32.mrb[0].mxu0
  %v296 = vpop.f32.mrb[0].mxu0
  %v297 = vadd.f32 %v68, %v296
  %v298 = vpop.f32.mrb[0].mxu0
  %299 = vmatprep.mubr.bf16.mxu0 0
  %300 = vmatmul.mubr.bf16.gmra.mrb[0].mxu0 %v185
  %v301 = vpop.f32.mrb[0].mxu0
  %v302 = vadd.f32 %v68, %v301
  %v303 = vpop.f32.mrb[0].mxu0
  %v304 = vpop.f32.mrb[0].mxu0
  %v305 = vadd.f32 %v68, %v304
  %v306 = vpop.f32.mrb[0].mxu0
  %307 = vmatprep.mubr.bf16.mxu0 0
  %308 = vmatmul.mubr.bf16.gmra.mrb[0].mxu0 %v188
  %v309 = vpop.f32.mrb[0].mxu0
  %v310 = vadd.f32 %v68, %v309
  %v311 = vpop.f32.mrb[0].mxu0
  %v312 = vpop.f32.mrb[0].mxu0
  %v313 = vadd.f32 %v68, %v312
  %v314 = vpop.f32.mrb[0].mxu0
  %315 = vmatprep.mubr.bf16.mxu0 0
  %316 = vmatmul.mubr.bf16.gmra.mrb[0].mxu0 %v191
  %v317 = vpop.f32.mrb[0].mxu0
  %v318 = vadd.f32 %v68, %v317
  %v319 = vpop.f32.mrb[0].mxu0
  %v320 = vpop.f32.mrb[0].mxu0
  %v321 = vadd.f32 %v68, %v320
  %v322 = vpop.f32.mrb[0].mxu0
  %323 = vmatprep.mubr.bf16.mxu0 0
  %324 = vmatmul.mubr.bf16.gmra.mrb[0].mxu0 %v194
  %v325 = vpop.f32.mrb[0].mxu0
  %v326 = vadd.f32 %v68, %v325
  %v327 = vpop.f32.mrb[0].mxu0
  %v328 = vpop.f32.mrb[0].mxu0
  %v329 = vadd.f32 %v68, %v328
  %v330 = vpop.f32.mrb[0].mxu0
  %331 = vmatprep.mubr.bf16.mxu0 0
  %332 = vmatmul.mubr.bf16.gmra.mrb[0].mxu0 %v197
  %v333 = vpop.f32.mrb[0].mxu0
  %v334 = vadd.f32 %v68, %v333
  %v335 = vpop.f32.mrb[0].mxu0
  %v336 = vpop.f32.mrb[0].mxu0
  %v337 = vadd.f32 %v68, %v336
  %v338 = vpop.f32.mrb[0].mxu0
  %339 = vmatprep.mubr.bf16.mxu0 0
  %340 = vmatmul.mubr.bf16.gmra.mrb[0].mxu0 %v200
  %v341 = vpop.f32.mrb[0].mxu0
  %v342 = vadd.f32 %v68, %v341
  %v343 = vpop.f32.mrb[0].mxu0
  %v344 = vpop.f32.mrb[0].mxu0
  %v345 = vadd.f32 %v68, %v344
  %v346 = vpop.f32.mrb[0].mxu0
  %347 = vmatprep.mubr.bf16.mxu0 0
  %348 = vmatmul.mubr.bf16.gmra.mrb[0].mxu0 %v203
  %v349 = vpop.f32.mrb[0].mxu0
  %v350 = vadd.f32 %v68, %v349
  %v351 = vpop.f32.mrb[0].mxu0
  %v352 = vpop.f32.mrb[0].mxu0
  %v353 = vadd.f32 %v68, %v352
  %v354 = vpop.f32.mrb[0].mxu0
  %355 = vmatprep.mubr.bf16.mxu0 0
  %356 = vmatmul.mubr.bf16.gmra.mrb[0].mxu0 %v206
  %v357 = vpop.f32.mrb[0].mxu0
  %v358 = vadd.f32 %v68, %v357
  %v359 = vpop.f32.mrb[0].mxu0
  %v360 = vpop.f32.mrb[0].mxu0
  %v361 = vadd.f32 %v68, %v360
  %v362 = vpop.f32.mrb[0].mxu0
  %363 = vmatprep.mubr.bf16.mxu0 0
  %364 = vmatmul.mubr.bf16.gmra.mrb[0].mxu0 %v209
  %v365 = vpop.f32.mrb[0].mxu0
  %v366 = vadd.f32 %v68, %v365
  %v367 = vpop.f32.mrb[0].mxu0
  %v368 = vpop.f32.mrb[0].mxu0
  %v369 = vadd.f32 %v68, %v368
  %v370 = vpop.f32.mrb[0].mxu0
  %371 = vdwg.mxu0
  %v372 = vmax.f32 %v246, 0.0
  %v373 = vmax.f32 %v249, 0.0
  %v374 = vmax.f32 %v254, 0.0
  %v375 = vmax.f32 %v257, 0.0
  %v376 = vmax.f32 %v262, 0.0
  %v377 = vmax.f32 %v265, 0.0
  %v378 = vmax.f32 %v270, 0.0
  %v379 = vmax.f32 %v273, 0.0
  %v380 = vmax.f32 %v278, 0.0
  %v381 = vmax.f32 %v281, 0.0
  %v382 = vmax.f32 %v286, 0.0
  %v383 = vmax.f32 %v289, 0.0
  %v384 = vmax.f32 %v294, 0.0
  %v385 = vmax.f32 %v297, 0.0
  %v386 = vmax.f32 %v302, 0.0
  %v387 = vmax.f32 %v305, 0.0
  %v388 = vmax.f32 %v310, 0.0
  %v389 = vmax.f32 %v313, 0.0
  %v390 = vmax.f32 %v318, 0.0
  %v391 = vmax.f32 %v321, 0.0
  %v392 = vmax.f32 %v326, 0.0
  %v393 = vmax.f32 %v329, 0.0
  %v394 = vmax.f32 %v334, 0.0
  %v395 = vmax.f32 %v337, 0.0
  %v396 = vmax.f32 %v342, 0.0
  %v397 = vmax.f32 %v345, 0.0
  %v398 = vmax.f32 %v350, 0.0
  %v399 = vmax.f32 %v353, 0.0
  %v400 = vmax.f32 %v358, 0.0
  %v401 = vmax.f32 %v361, 0.0
  %v402 = vmax.f32 %v366, 0.0
  %v403 = vmax.f32 %v369, 0.0
  %v404 = vld [vmem:[%s3] sm:$0xf]
  %v405 = vld [vmem:[%s3 + $0x4] sm:$0xf]
  %v406 = vld [vmem:[%s3 + $0x8] sm:$0xf]
  %v407 = vld [vmem:[%s3 + $0xc] sm:$0xf]
  %v408 = vld [vmem:[%s3 + $0x10] sm:$0xf]
  %v409 = vld [vmem:[%s3 + $0x14] sm:$0xf]
  %v410 = vld [vmem:[%s3 + $0x18] sm:$0xf]
  %v411 = vld [vmem:[%s3 + $0x1c] sm:$0xf]
  %v412 = vld [vmem:[%s4] sm:$0x1]
  %v413 = vpack.c.bf16 %v373, %v372
  %v414 = vpack.c.bf16 %v375, %v374
  %v415 = vpack.c.bf16 %v377, %v376
  %v416 = vpack.c.bf16 %v379, %v378
  %v417 = vpack.c.bf16 %v381, %v380
  %v418 = vpack.c.bf16 %v383, %v382
  %v419 = vpack.c.bf16 %v385, %v384
  %v420 = vpack.c.bf16 %v387, %v386
  %v421 = vpack.c.bf16 %v389, %v388
  %v422 = vpack.c.bf16 %v391, %v390
  %v423 = vpack.c.bf16 %v393, %v392
  %v424 = vpack.c.bf16 %v395, %v394
  %v425 = vpack.c.bf16 %v397, %v396
  %v426 = vpack.c.bf16 %v399, %v398
  %v427 = vpack.c.bf16 %v401, %v400
  %v428 = vpack.c.bf16 %v403, %v402
  %v430 = vlaneseq
  %v431 = vshrl.u32 %v430, 7
  %v432 = vsub.s32 0, %v431
  %v433 = vrot.slane %v412, %v432
  %v443 = vunpack.c.l.b16 %v404
  %v444 = vunpack.c.l.b16 %v405
  %v445 = vunpack.c.l.b16 %v406
  %v446 = vunpack.c.l.b16 %v407
  %v447 = vunpack.c.l.b16 %v408
  %v448 = vunpack.c.l.b16 %v409
  %v449 = vunpack.c.l.b16 %v410
  %v450 = vunpack.c.l.b16 %v411
  %v451 = vpack.c.b16 %v444, %v443
  %v452 = vpack.c.b16 %v446, %v445
  %v453 = vpack.c.b16 %v448, %v447
  %v454 = vpack.c.b16 %v450, %v449
  %vm459 = vcmask 523264
  %v461 = vsel %vm459, %v413, 0
  %v464 = vsel %vm459, %v414, 0
  %v467 = vsel %vm459, %v415, 0
  %v470 = vsel %vm459, %v416, 0
  %v473 = vsel %vm459, %v417, 0
  %v476 = vsel %vm459, %v418, 0
  %v479 = vsel %vm459, %v419, 0
  %v482 = vsel %vm459, %v420, 0
  %v485 = vsel %vm459, %v421, 0
  %v488 = vsel %vm459, %v422, 0
  %v491 = vsel %vm459, %v423, 0
  %v494 = vsel %vm459, %v424, 0
  %v497 = vsel %vm459, %v425, 0
  %v500 = vsel %vm459, %v426, 0
  %v503 = vsel %vm459, %v427, 0
  %v506 = vsel %vm459, %v428, 0
  %508 = vmatprep.subr.bf16.mxu0 0
  %509 = vmatpush1.bf16.msra.mxu0 %v451
  %510 = vmatprep.subr.bf16.mxu0 0
  %511 = vmatpush1.bf16.msra.mxu0 %v452
  %512 = vmatprep.subr.bf16.mxu0 0
  %513 = vmatpush1.bf16.msra.mxu0 %v453
  %514 = vmatprep.subr.bf16.mxu0 0
  %515 = vmatpush1.bf16.msra.mxu0 %v454
  %516 = vmatprep.subr.bf16.mxu0 0
  %517 = vmatpush1.bf16.msra.mxu0 0
  %518 = vmatprep.subr.bf16.mxu0 0
  %519 = vmatpush1.bf16.msra.mxu0 0
  %520 = vmatprep.subr.bf16.mxu0 0
  %521 = vmatpush1.bf16.msra.mxu0 0
  %522 = vmatprep.subr.bf16.mxu0 0
  %523 = vmatpush1.bf16.msra.mxu0 0
  %524 = vmatprep.subr.bf16.mxu0 0
  %525 = vmatpush1.bf16.msra.mxu0 0
  %526 = vmatprep.subr.bf16.mxu0 0
  %527 = vmatpush1.bf16.msra.mxu0 0
  %528 = vmatprep.subr.bf16.mxu0 0
  %529 = vmatpush1.bf16.msra.mxu0 0
  %530 = vmatprep.subr.bf16.mxu0 0
  %531 = vmatpush1.bf16.msra.mxu0 0
  %532 = vmatprep.subr.bf16.mxu0 0
  %533 = vmatpush1.bf16.msra.mxu0 0
  %534 = vmatprep.subr.bf16.mxu0 0
  %535 = vmatpush1.bf16.msra.mxu0 0
  %536 = vmatprep.subr.bf16.mxu0 0
  %537 = vmatpush1.bf16.msra.mxu0 0
  %538 = vmatprep.subr.bf16.mxu0 0
  %539 = vmatpush1.bf16.msra.mxu0 0
  %540 = vmatprep.mubr.bf16.mxu0 0
  %541 = vmatmul.mubr.bf16.gmra.mrb[0].mxu0 %v461
  %v542 = vpop.f32.mrb[0].mxu0
  %v543 = vadd.f32 %v433, %v542
  %v544 = vpop.f32.mrb[0].mxu0
  %v545 = vpop.f32.mrb[0].mxu0
  %v546 = vadd.f32 %v433, %v545
  %v547 = vpop.f32.mrb[0].mxu0
  %548 = vmatprep.mubr.bf16.mxu0 0
  %549 = vmatmul.mubr.bf16.gmra.mrb[0].mxu0 %v464
  %v550 = vpop.f32.mrb[0].mxu0
  %v551 = vadd.f32 %v433, %v550
  %v552 = vpop.f32.mrb[0].mxu0
  %v553 = vpop.f32.mrb[0].mxu0
  %v554 = vadd.f32 %v433, %v553
  %v555 = vpop.f32.mrb[0].mxu0
  %556 = vmatprep.mubr.bf16.mxu0 0
  %557 = vmatmul.mubr.bf16.gmra.mrb[0].mxu0 %v467
  %v558 = vpop.f32.mrb[0].mxu0
  %v559 = vadd.f32 %v433, %v558
  %v560 = vpop.f32.mrb[0].mxu0
  %v561 = vpop.f32.mrb[0].mxu0
  %v562 = vadd.f32 %v433, %v561
  %v563 = vpop.f32.mrb[0].mxu0
  %564 = vmatprep.mubr.bf16.mxu0 0
  %565 = vmatmul.mubr.bf16.gmra.mrb[0].mxu0 %v470
  %v566 = vpop.f32.mrb[0].mxu0
  %v567 = vadd.f32 %v433, %v566
  %v568 = vpop.f32.mrb[0].mxu0
  %v569 = vpop.f32.mrb[0].mxu0
  %v570 = vadd.f32 %v433, %v569
  %v571 = vpop.f32.mrb[0].mxu0
  %572 = vmatprep.mubr.bf16.mxu0 0
  %573 = vmatmul.mubr.bf16.gmra.mrb[0].mxu0 %v473
  %v574 = vpop.f32.mrb[0].mxu0
  %v575 = vadd.f32 %v433, %v574
  %v576 = vpop.f32.mrb[0].mxu0
  %v577 = vpop.f32.mrb[0].mxu0
  %v578 = vadd.f32 %v433, %v577
  %v579 = vpop.f32.mrb[0].mxu0
  %580 = vmatprep.mubr.bf16.mxu0 0
  %581 = vmatmul.mubr.bf16.gmra.mrb[0].mxu0 %v476
  %v582 = vpop.f32.mrb[0].mxu0
  %v583 = vadd.f32 %v433, %v582
  %v584 = vpop.f32.mrb[0].mxu0
  %v585 = vpop.f32.mrb[0].mxu0
  %v586 = vadd.f32 %v433, %v585
  %v587 = vpop.f32.mrb[0].mxu0
  %588 = vmatprep.mubr.bf16.mxu0 0
  %589 = vmatmul.mubr.bf16.gmra.mrb[0].mxu0 %v479
  %v590 = vpop.f32.mrb[0].mxu0
  %v591 = vadd.f32 %v433, %v590
  %v592 = vpop.f32.mrb[0].mxu0
  %v593 = vpop.f32.mrb[0].mxu0
  %v594 = vadd.f32 %v433, %v593
  %v595 = vpop.f32.mrb[0].mxu0
  %596 = vmatprep.mubr.bf16.mxu0 0
  %597 = vmatmul.mubr.bf16.gmra.mrb[0].mxu0 %v482
  %v598 = vpop.f32.mrb[0].mxu0
  %v599 = vadd.f32 %v433, %v598
  %v600 = vpop.f32.mrb[0].mxu0
  %v601 = vpop.f32.mrb[0].mxu0
  %v602 = vadd.f32 %v433, %v601
  %v603 = vpop.f32.mrb[0].mxu0
  %604 = vmatprep.mubr.bf16.mxu0 0
  %605 = vmatmul.mubr.bf16.gmra.mrb[0].mxu0 %v485
  %v606 = vpop.f32.mrb[0].mxu0
  %v607 = vadd.f32 %v433, %v606
  %v608 = vpop.f32.mrb[0].mxu0
  %v609 = vpop.f32.mrb[0].mxu0
  %v610 = vadd.f32 %v433, %v609
  %v611 = vpop.f32.mrb[0].mxu0
  %612 = vmatprep.mubr.bf16.mxu0 0
  %613 = vmatmul.mubr.bf16.gmra.mrb[0].mxu0 %v488
  %v614 = vpop.f32.mrb[0].mxu0
  %v615 = vadd.f32 %v433, %v614
  %v616 = vpop.f32.mrb[0].mxu0
  %v617 = vpop.f32.mrb[0].mxu0
  %v618 = vadd.f32 %v433, %v617
  %v619 = vpop.f32.mrb[0].mxu0
  %620 = vmatprep.mubr.bf16.mxu0 0
  %621 = vmatmul.mubr.bf16.gmra.mrb[0].mxu0 %v491
  %v622 = vpop.f32.mrb[0].mxu0
  %v623 = vadd.f32 %v433, %v622
  %v624 = vpop.f32.mrb[0].mxu0
  %v625 = vpop.f32.mrb[0].mxu0
  %v626 = vadd.f32 %v433, %v625
  %v627 = vpop.f32.mrb[0].mxu0
  %628 = vmatprep.mubr.bf16.mxu0 0
  %629 = vmatmul.mubr.bf16.gmra.mrb[0].mxu0 %v494
  %v630 = vpop.f32.mrb[0].mxu0
  %v631 = vadd.f32 %v433, %v630
  %v632 = vpop.f32.mrb[0].mxu0
  %v633 = vpop.f32.mrb[0].mxu0
  %v634 = vadd.f32 %v433, %v633
  %v635 = vpop.f32.mrb[0].mxu0
  %636 = vmatprep.mubr.bf16.mxu0 0
  %637 = vmatmul.mubr.bf16.gmra.mrb[0].mxu0 %v497
  %v638 = vpop.f32.mrb[0].mxu0
  %v639 = vadd.f32 %v433, %v638
  %v640 = vpop.f32.mrb[0].mxu0
  %v641 = vpop.f32.mrb[0].mxu0
  %v642 = vadd.f32 %v433, %v641
  %v643 = vpop.f32.mrb[0].mxu0
  %644 = vmatprep.mubr.bf16.mxu0 0
  %645 = vmatmul.mubr.bf16.gmra.mrb[0].mxu0 %v500
  %v646 = vpop.f32.mrb[0].mxu0
  %v647 = vadd.f32 %v433, %v646
  %v648 = vpop.f32.mrb[0].mxu0
  %v649 = vpop.f32.mrb[0].mxu0
  %v650 = vadd.f32 %v433, %v649
  %v651 = vpop.f32.mrb[0].mxu0
  %652 = vmatprep.mubr.bf16.mxu0 0
  %653 = vmatmul.mubr.bf16.gmra.mrb[0].mxu0 %v503
  %v654 = vpop.f32.mrb[0].mxu0
  %v655 = vadd.f32 %v433, %v654
  %v656 = vpop.f32.mrb[0].mxu0
  %v657 = vpop.f32.mrb[0].mxu0
  %v658 = vadd.f32 %v433, %v657
  %v659 = vpop.f32.mrb[0].mxu0
  %660 = vmatprep.mubr.bf16.mxu0 0
  %661 = vmatmul.mubr.bf16.gmra.mrb[0].mxu0 %v506
  %v662 = vpop.f32.mrb[0].mxu0
  %v663 = vadd.f32 %v433, %v662
  %v664 = vpop.f32.mrb[0].mxu0
  %v665 = vpop.f32.mrb[0].mxu0
  %v666 = vadd.f32 %v433, %v665
  %v667 = vpop.f32.mrb[0].mxu0
  %668 = vdwg.mxu0
  %v669 = vmax.f32 %v543, 0.0
  %v670 = vmax.f32 %v546, 0.0
  %v671 = vmax.f32 %v551, 0.0
  %v672 = vmax.f32 %v554, 0.0
  %v673 = vmax.f32 %v559, 0.0
  %v674 = vmax.f32 %v562, 0.0
  %v675 = vmax.f32 %v567, 0.0
  %v676 = vmax.f32 %v570, 0.0
  %v677 = vmax.f32 %v575, 0.0
  %v678 = vmax.f32 %v578, 0.0
  %v679 = vmax.f32 %v583, 0.0
  %v680 = vmax.f32 %v586, 0.0
  %v681 = vmax.f32 %v591, 0.0
  %v682 = vmax.f32 %v594, 0.0
  %v683 = vmax.f32 %v599, 0.0
  %v684 = vmax.f32 %v602, 0.0
  %v685 = vmax.f32 %v607, 0.0
  %v686 = vmax.f32 %v610, 0.0
  %v687 = vmax.f32 %v615, 0.0
  %v688 = vmax.f32 %v618, 0.0
  %v689 = vmax.f32 %v623, 0.0
  %v690 = vmax.f32 %v626, 0.0
  %v691 = vmax.f32 %v631, 0.0
  %v692 = vmax.f32 %v634, 0.0
  %v693 = vmax.f32 %v639, 0.0
  %v694 = vmax.f32 %v642, 0.0
  %v695 = vmax.f32 %v647, 0.0
  %v696 = vmax.f32 %v650, 0.0
  %v697 = vmax.f32 %v655, 0.0
  %v698 = vmax.f32 %v658, 0.0
  %v699 = vmax.f32 %v663, 0.0
  %v700 = vmax.f32 %v666, 0.0
  %v701 = vld [vmem:[%s5] sm:$0xf]
  %v702 = vld [vmem:[%s5 + $0x4] sm:$0xf]
  %v703 = vld [vmem:[%s5 + $0x8] sm:$0xf]
  %v704 = vld [vmem:[%s5 + $0xc] sm:$0xf]
  %v705 = vld [vmem:[%s5 + $0x10] sm:$0xf]
  %v706 = vld [vmem:[%s5 + $0x14] sm:$0xf]
  %v707 = vld [vmem:[%s5 + $0x18] sm:$0xf]
  %v708 = vld [vmem:[%s5 + $0x1c] sm:$0xf]
  %v709 = vld [vmem:[%s6] sm:$0x1]
  %v710 = vpack.c.bf16 %v670, %v669
  %v711 = vpack.c.bf16 %v672, %v671
  %v712 = vpack.c.bf16 %v674, %v673
  %v713 = vpack.c.bf16 %v676, %v675
  %v714 = vpack.c.bf16 %v678, %v677
  %v715 = vpack.c.bf16 %v680, %v679
  %v716 = vpack.c.bf16 %v682, %v681
  %v717 = vpack.c.bf16 %v684, %v683
  %v718 = vpack.c.bf16 %v686, %v685
  %v719 = vpack.c.bf16 %v688, %v687
  %v720 = vpack.c.bf16 %v690, %v689
  %v721 = vpack.c.bf16 %v692, %v691
  %v722 = vpack.c.bf16 %v694, %v693
  %v723 = vpack.c.bf16 %v696, %v695
  %v724 = vpack.c.bf16 %v698, %v697
  %v725 = vpack.c.bf16 %v700, %v699
  %v727 = vlaneseq
  %v728 = vshrl.u32 %v727, 7
  %v729 = vsub.s32 0, %v728
  %v730 = vrot.slane %v709, %v729
  %v740 = vunpack.c.l.b16 %v701
  %v741 = vunpack.c.l.b16 %v702
  %v742 = vunpack.c.l.b16 %v703
  %v743 = vunpack.c.l.b16 %v704
  %v744 = vunpack.c.l.b16 %v705
  %v745 = vunpack.c.l.b16 %v706
  %v746 = vunpack.c.l.b16 %v707
  %v747 = vunpack.c.l.b16 %v708
  %v748 = vpack.c.b16 %v741, %v740
  %v749 = vpack.c.b16 %v743, %v742
  %v750 = vpack.c.b16 %v745, %v744
  %v751 = vpack.c.b16 %v747, %v746
  %v757 = vsel %vm459, %v710, 0
  %v760 = vsel %vm459, %v711, 0
  %v763 = vsel %vm459, %v712, 0
  %v766 = vsel %vm459, %v713, 0
  %v769 = vsel %vm459, %v714, 0
  %v772 = vsel %vm459, %v715, 0
  %v775 = vsel %vm459, %v716, 0
  %v778 = vsel %vm459, %v717, 0
  %v781 = vsel %vm459, %v718, 0
  %v784 = vsel %vm459, %v719, 0
  %v787 = vsel %vm459, %v720, 0
  %v790 = vsel %vm459, %v721, 0
  %v793 = vsel %vm459, %v722, 0
  %v796 = vsel %vm459, %v723, 0
  %v799 = vsel %vm459, %v724, 0
  %v802 = vsel %vm459, %v725, 0
  %804 = vmatprep.subr.bf16.mxu0 0
  %805 = vmatpush1.bf16.msra.mxu0 %v748
  %806 = vmatprep.subr.bf16.mxu0 0
  %807 = vmatpush1.bf16.msra.mxu0 %v749
  %808 = vmatprep.subr.bf16.mxu0 0
  %809 = vmatpush1.bf16.msra.mxu0 %v750
  %810 = vmatprep.subr.bf16.mxu0 0
  %811 = vmatpush1.bf16.msra.mxu0 %v751
  %812 = vmatprep.subr.bf16.mxu0 0
  %813 = vmatpush1.bf16.msra.mxu0 0
  %814 = vmatprep.subr.bf16.mxu0 0
  %815 = vmatpush1.bf16.msra.mxu0 0
  %816 = vmatprep.subr.bf16.mxu0 0
  %817 = vmatpush1.bf16.msra.mxu0 0
  %818 = vmatprep.subr.bf16.mxu0 0
  %819 = vmatpush1.bf16.msra.mxu0 0
  %820 = vmatprep.subr.bf16.mxu0 0
  %821 = vmatpush1.bf16.msra.mxu0 0
  %822 = vmatprep.subr.bf16.mxu0 0
  %823 = vmatpush1.bf16.msra.mxu0 0
  %824 = vmatprep.subr.bf16.mxu0 0
  %825 = vmatpush1.bf16.msra.mxu0 0
  %826 = vmatprep.subr.bf16.mxu0 0
  %827 = vmatpush1.bf16.msra.mxu0 0
  %828 = vmatprep.subr.bf16.mxu0 0
  %829 = vmatpush1.bf16.msra.mxu0 0
  %830 = vmatprep.subr.bf16.mxu0 0
  %831 = vmatpush1.bf16.msra.mxu0 0
  %832 = vmatprep.subr.bf16.mxu0 0
  %833 = vmatpush1.bf16.msra.mxu0 0
  %834 = vmatprep.subr.bf16.mxu0 0
  %835 = vmatpush1.bf16.msra.mxu0 0
  %836 = vmatprep.mubr.bf16.mxu0 0
  %837 = vmatmul.mubr.bf16.gmra.mrb[0].mxu0 %v757
  %v838 = vpop.f32.mrb[0].mxu0
  %v839 = vadd.f32 %v730, %v838
  %v840 = vpop.f32.mrb[0].mxu0
  %v841 = vpop.f32.mrb[0].mxu0
  %v842 = vadd.f32 %v730, %v841
  %v843 = vpop.f32.mrb[0].mxu0
  %844 = vmatprep.mubr.bf16.mxu0 0
  %845 = vmatmul.mubr.bf16.gmra.mrb[0].mxu0 %v760
  %v846 = vpop.f32.mrb[0].mxu0
  %v847 = vadd.f32 %v730, %v846
  %v848 = vpop.f32.mrb[0].mxu0
  %v849 = vpop.f32.mrb[0].mxu0
  %v850 = vadd.f32 %v730, %v849
  %v851 = vpop.f32.mrb[0].mxu0
  %852 = vmatprep.mubr.bf16.mxu0 0
  %853 = vmatmul.mubr.bf16.gmra.mrb[0].mxu0 %v763
  %v854 = vpop.f32.mrb[0].mxu0
  %v855 = vadd.f32 %v730, %v854
  %v856 = vpop.f32.mrb[0].mxu0
  %v857 = vpop.f32.mrb[0].mxu0
  %v858 = vadd.f32 %v730, %v857
  %v859 = vpop.f32.mrb[0].mxu0
  %860 = vmatprep.mubr.bf16.mxu0 0
  %861 = vmatmul.mubr.bf16.gmra.mrb[0].mxu0 %v766
  %v862 = vpop.f32.mrb[0].mxu0
  %v863 = vadd.f32 %v730, %v862
  %v864 = vpop.f32.mrb[0].mxu0
  %v865 = vpop.f32.mrb[0].mxu0
  %v866 = vadd.f32 %v730, %v865
  %v867 = vpop.f32.mrb[0].mxu0
  %868 = vmatprep.mubr.bf16.mxu0 0
  %869 = vmatmul.mubr.bf16.gmra.mrb[0].mxu0 %v769
  %v870 = vpop.f32.mrb[0].mxu0
  %v871 = vadd.f32 %v730, %v870
  %v872 = vpop.f32.mrb[0].mxu0
  %v873 = vpop.f32.mrb[0].mxu0
  %v874 = vadd.f32 %v730, %v873
  %v875 = vpop.f32.mrb[0].mxu0
  %876 = vmatprep.mubr.bf16.mxu0 0
  %877 = vmatmul.mubr.bf16.gmra.mrb[0].mxu0 %v772
  %v878 = vpop.f32.mrb[0].mxu0
  %v879 = vadd.f32 %v730, %v878
  %v880 = vpop.f32.mrb[0].mxu0
  %v881 = vpop.f32.mrb[0].mxu0
  %v882 = vadd.f32 %v730, %v881
  %v883 = vpop.f32.mrb[0].mxu0
  %884 = vmatprep.mubr.bf16.mxu0 0
  %885 = vmatmul.mubr.bf16.gmra.mrb[0].mxu0 %v775
  %v886 = vpop.f32.mrb[0].mxu0
  %v887 = vadd.f32 %v730, %v886
  %v888 = vpop.f32.mrb[0].mxu0
  %v889 = vpop.f32.mrb[0].mxu0
  %v890 = vadd.f32 %v730, %v889
  %v891 = vpop.f32.mrb[0].mxu0
  %892 = vmatprep.mubr.bf16.mxu0 0
  %893 = vmatmul.mubr.bf16.gmra.mrb[0].mxu0 %v778
  %v894 = vpop.f32.mrb[0].mxu0
  %v895 = vadd.f32 %v730, %v894
  %v896 = vpop.f32.mrb[0].mxu0
  %v897 = vpop.f32.mrb[0].mxu0
  %v898 = vadd.f32 %v730, %v897
  %v899 = vpop.f32.mrb[0].mxu0
  %900 = vmatprep.mubr.bf16.mxu0 0
  %901 = vmatmul.mubr.bf16.gmra.mrb[0].mxu0 %v781
  %v902 = vpop.f32.mrb[0].mxu0
  %v903 = vadd.f32 %v730, %v902
  %v904 = vpop.f32.mrb[0].mxu0
  %v905 = vpop.f32.mrb[0].mxu0
  %v906 = vadd.f32 %v730, %v905
  %v907 = vpop.f32.mrb[0].mxu0
  %908 = vmatprep.mubr.bf16.mxu0 0
  %909 = vmatmul.mubr.bf16.gmra.mrb[0].mxu0 %v784
  %v910 = vpop.f32.mrb[0].mxu0
  %v911 = vadd.f32 %v730, %v910
  %v912 = vpop.f32.mrb[0].mxu0
  %v913 = vpop.f32.mrb[0].mxu0
  %v914 = vadd.f32 %v730, %v913
  %v915 = vpop.f32.mrb[0].mxu0
  %916 = vmatprep.mubr.bf16.mxu0 0
  %917 = vmatmul.mubr.bf16.gmra.mrb[0].mxu0 %v787
  %v918 = vpop.f32.mrb[0].mxu0
  %v919 = vadd.f32 %v730, %v918
  %v920 = vpop.f32.mrb[0].mxu0
  %v921 = vpop.f32.mrb[0].mxu0
  %v922 = vadd.f32 %v730, %v921
  %v923 = vpop.f32.mrb[0].mxu0
  %924 = vmatprep.mubr.bf16.mxu0 0
  %925 = vmatmul.mubr.bf16.gmra.mrb[0].mxu0 %v790
  %v926 = vpop.f32.mrb[0].mxu0
  %v927 = vadd.f32 %v730, %v926
  %v928 = vpop.f32.mrb[0].mxu0
  %v929 = vpop.f32.mrb[0].mxu0
  %v930 = vadd.f32 %v730, %v929
  %v931 = vpop.f32.mrb[0].mxu0
  %932 = vmatprep.mubr.bf16.mxu0 0
  %933 = vmatmul.mubr.bf16.gmra.mrb[0].mxu0 %v793
  %v934 = vpop.f32.mrb[0].mxu0
  %v935 = vadd.f32 %v730, %v934
  %v936 = vpop.f32.mrb[0].mxu0
  %v937 = vpop.f32.mrb[0].mxu0
  %v938 = vadd.f32 %v730, %v937
  %v939 = vpop.f32.mrb[0].mxu0
  %940 = vmatprep.mubr.bf16.mxu0 0
  %941 = vmatmul.mubr.bf16.gmra.mrb[0].mxu0 %v796
  %v942 = vpop.f32.mrb[0].mxu0
  %v943 = vadd.f32 %v730, %v942
  %v944 = vpop.f32.mrb[0].mxu0
  %v945 = vpop.f32.mrb[0].mxu0
  %v946 = vadd.f32 %v730, %v945
  %v947 = vpop.f32.mrb[0].mxu0
  %948 = vmatprep.mubr.bf16.mxu0 0
  %949 = vmatmul.mubr.bf16.gmra.mrb[0].mxu0 %v799
  %v950 = vpop.f32.mrb[0].mxu0
  %v951 = vadd.f32 %v730, %v950
  %v952 = vpop.f32.mrb[0].mxu0
  %v953 = vpop.f32.mrb[0].mxu0
  %v954 = vadd.f32 %v730, %v953
  %v955 = vpop.f32.mrb[0].mxu0
  %956 = vmatprep.mubr.bf16.mxu0 0
  %957 = vmatmul.mubr.bf16.gmra.mrb[0].mxu0 %v802
  %v958 = vpop.f32.mrb[0].mxu0
  %v959 = vadd.f32 %v730, %v958
  %v960 = vpop.f32.mrb[0].mxu0
  %v961 = vpop.f32.mrb[0].mxu0
  %v962 = vadd.f32 %v730, %v961
  %v963 = vpop.f32.mrb[0].mxu0
  %964 = vdwg.mxu0
  %v965 = vlaneseq
  %v966 = vand.u32 %v965, 127
  %vm967 = vcmp.lt.s32.totalorder %v966, 8
  %v968 = vsel %vm967, %v839, -1e+30
  %v969 = vsel %vm967, %v842, -1e+30
  %v970 = vsel %vm967, %v847, -1e+30
  %v971 = vsel %vm967, %v850, -1e+30
  %v972 = vsel %vm967, %v855, -1e+30
  %v973 = vsel %vm967, %v858, -1e+30
  %v974 = vsel %vm967, %v863, -1e+30
  %v975 = vsel %vm967, %v866, -1e+30
  %v976 = vsel %vm967, %v871, -1e+30
  %v977 = vsel %vm967, %v874, -1e+30
  %v978 = vsel %vm967, %v879, -1e+30
  %v979 = vsel %vm967, %v882, -1e+30
  %v980 = vsel %vm967, %v887, -1e+30
  %v981 = vsel %vm967, %v890, -1e+30
  %v982 = vsel %vm967, %v895, -1e+30
  %v983 = vsel %vm967, %v898, -1e+30
  %v984 = vsel %vm967, %v903, -1e+30
  %v985 = vsel %vm967, %v906, -1e+30
  %v986 = vsel %vm967, %v911, -1e+30
  %v987 = vsel %vm967, %v914, -1e+30
  %v988 = vsel %vm967, %v919, -1e+30
  %v989 = vsel %vm967, %v922, -1e+30
  %v990 = vsel %vm967, %v927, -1e+30
  %v991 = vsel %vm967, %v930, -1e+30
  %v992 = vsel %vm967, %v935, -1e+30
  %v993 = vsel %vm967, %v938, -1e+30
  %v994 = vsel %vm967, %v943, -1e+30
  %v995 = vsel %vm967, %v946, -1e+30
  %v996 = vsel %vm967, %v951, -1e+30
  %v997 = vsel %vm967, %v954, -1e+30
  %v998 = vsel %vm967, %v959, -1e+30
  %v999 = vsel %vm967, %v962, -1e+30
  %1000 = vmax.xlane.f32.xlu0 %v968
  %v1001 = vpop.xlane.xlu0 %1000
  %1002 = vmax.xlane.f32.xlu0 %v969
  %v1003 = vpop.xlane.xlu0 %1002
  %1004 = vmax.xlane.f32.xlu0 %v970
  %v1005 = vpop.xlane.xlu0 %1004
  %1006 = vmax.xlane.f32.xlu0 %v971
  %v1007 = vpop.xlane.xlu0 %1006
  %1008 = vmax.xlane.f32.xlu0 %v972
  %v1009 = vpop.xlane.xlu0 %1008
  %1010 = vmax.xlane.f32.xlu0 %v973
  %v1011 = vpop.xlane.xlu0 %1010
  %1012 = vmax.xlane.f32.xlu0 %v974
  %v1013 = vpop.xlane.xlu0 %1012
  %1014 = vmax.xlane.f32.xlu0 %v975
  %v1015 = vpop.xlane.xlu0 %1014
  %1016 = vmax.xlane.f32.xlu0 %v976
  %v1017 = vpop.xlane.xlu0 %1016
  %1018 = vmax.xlane.f32.xlu0 %v977
  %v1019 = vpop.xlane.xlu0 %1018
  %1020 = vmax.xlane.f32.xlu0 %v978
  %v1021 = vpop.xlane.xlu0 %1020
  %1022 = vmax.xlane.f32.xlu0 %v979
  %v1023 = vpop.xlane.xlu0 %1022
  %1024 = vmax.xlane.f32.xlu0 %v980
  %v1025 = vpop.xlane.xlu0 %1024
  %1026 = vmax.xlane.f32.xlu0 %v981
  %v1027 = vpop.xlane.xlu0 %1026
  %1028 = vmax.xlane.f32.xlu0 %v982
  %v1029 = vpop.xlane.xlu0 %1028
  %1030 = vmax.xlane.f32.xlu0 %v983
  %v1031 = vpop.xlane.xlu0 %1030
  %1032 = vmax.xlane.f32.xlu0 %v984
  %v1033 = vpop.xlane.xlu0 %1032
  %1034 = vmax.xlane.f32.xlu0 %v985
  %v1035 = vpop.xlane.xlu0 %1034
  %1036 = vmax.xlane.f32.xlu0 %v986
  %v1037 = vpop.xlane.xlu0 %1036
  %1038 = vmax.xlane.f32.xlu0 %v987
  %v1039 = vpop.xlane.xlu0 %1038
  %1040 = vmax.xlane.f32.xlu0 %v988
  %v1041 = vpop.xlane.xlu0 %1040
  %1042 = vmax.xlane.f32.xlu0 %v989
  %v1043 = vpop.xlane.xlu0 %1042
  %1044 = vmax.xlane.f32.xlu0 %v990
  %v1045 = vpop.xlane.xlu0 %1044
  %1046 = vmax.xlane.f32.xlu0 %v991
  %v1047 = vpop.xlane.xlu0 %1046
  %1048 = vmax.xlane.f32.xlu0 %v992
  %v1049 = vpop.xlane.xlu0 %1048
  %1050 = vmax.xlane.f32.xlu0 %v993
  %v1051 = vpop.xlane.xlu0 %1050
  %1052 = vmax.xlane.f32.xlu0 %v994
  %v1053 = vpop.xlane.xlu0 %1052
  %1054 = vmax.xlane.f32.xlu0 %v995
  %v1055 = vpop.xlane.xlu0 %1054
  %1056 = vmax.xlane.f32.xlu0 %v996
  %v1057 = vpop.xlane.xlu0 %1056
  %1058 = vmax.xlane.f32.xlu0 %v997
  %v1059 = vpop.xlane.xlu0 %1058
  %1060 = vmax.xlane.f32.xlu0 %v998
  %v1061 = vpop.xlane.xlu0 %1060
  %1062 = vmax.xlane.f32.xlu0 %v999
  %v1063 = vpop.xlane.xlu0 %1062
  %v1064 = vsub.f32 %v968, %v1001
  %v1065 = vsub.f32 %v969, %v1003
  %v1066 = vsub.f32 %v970, %v1005
  %v1067 = vsub.f32 %v971, %v1007
  %v1068 = vsub.f32 %v972, %v1009
  %v1069 = vsub.f32 %v973, %v1011
  %v1070 = vsub.f32 %v974, %v1013
  %v1071 = vsub.f32 %v975, %v1015
  %v1072 = vsub.f32 %v976, %v1017
  %v1073 = vsub.f32 %v977, %v1019
  %v1074 = vsub.f32 %v978, %v1021
  %v1075 = vsub.f32 %v979, %v1023
  %v1076 = vsub.f32 %v980, %v1025
  %v1077 = vsub.f32 %v981, %v1027
  %v1078 = vsub.f32 %v982, %v1029
  %v1079 = vsub.f32 %v983, %v1031
  %v1080 = vsub.f32 %v984, %v1033
  %v1081 = vsub.f32 %v985, %v1035
  %v1082 = vsub.f32 %v986, %v1037
  %v1083 = vsub.f32 %v987, %v1039
  %v1084 = vsub.f32 %v988, %v1041
  %v1085 = vsub.f32 %v989, %v1043
  %v1086 = vsub.f32 %v990, %v1045
  %v1087 = vsub.f32 %v991, %v1047
  %v1088 = vsub.f32 %v992, %v1049
  %v1089 = vsub.f32 %v993, %v1051
  %v1090 = vsub.f32 %v994, %v1053
  %v1091 = vsub.f32 %v995, %v1055
  %v1092 = vsub.f32 %v996, %v1057
  %v1093 = vsub.f32 %v997, %v1059
  %v1094 = vsub.f32 %v998, %v1061
  %v1095 = vsub.f32 %v999, %v1063
  %v1096 = vmul.f32 %v1064, 1.442695
  %v1097 = vpow.pop %v1096
  %v1098 = vmul.f32 %v1065, 1.442695
  %v1099 = vpow.pop %v1098
  %v1100 = vmul.f32 %v1066, 1.442695
  %v1101 = vpow.pop %v1100
  %v1102 = vmul.f32 %v1067, 1.442695
  %v1103 = vpow.pop %v1102
  %v1104 = vmul.f32 %v1068, 1.442695
  %v1105 = vpow.pop %v1104
  %v1106 = vmul.f32 %v1069, 1.442695
  %v1107 = vpow.pop %v1106
  %v1108 = vmul.f32 %v1070, 1.442695
  %v1109 = vpow.pop %v1108
  %v1110 = vmul.f32 %v1071, 1.442695
  %v1111 = vpow.pop %v1110
  %v1112 = vmul.f32 %v1072, 1.442695
  %v1113 = vpow.pop %v1112
  %v1114 = vmul.f32 %v1073, 1.442695
  %v1115 = vpow.pop %v1114
  %v1116 = vmul.f32 %v1074, 1.442695
  %v1117 = vpow.pop %v1116
  %v1118 = vmul.f32 %v1075, 1.442695
  %v1119 = vpow.pop %v1118
  %v1120 = vmul.f32 %v1076, 1.442695
  %v1121 = vpow.pop %v1120
  %v1122 = vmul.f32 %v1077, 1.442695
  %v1123 = vpow.pop %v1122
  %v1124 = vmul.f32 %v1078, 1.442695
  %v1125 = vpow.pop %v1124
  %v1126 = vmul.f32 %v1079, 1.442695
  %v1127 = vpow.pop %v1126
  %v1128 = vmul.f32 %v1080, 1.442695
  %v1129 = vpow.pop %v1128
  %v1130 = vmul.f32 %v1081, 1.442695
  %v1131 = vpow.pop %v1130
  %v1132 = vmul.f32 %v1082, 1.442695
  %v1133 = vpow.pop %v1132
  %v1134 = vmul.f32 %v1083, 1.442695
  %v1135 = vpow.pop %v1134
  %v1136 = vmul.f32 %v1084, 1.442695
  %v1137 = vpow.pop %v1136
  %v1138 = vmul.f32 %v1085, 1.442695
  %v1139 = vpow.pop %v1138
  %v1140 = vmul.f32 %v1086, 1.442695
  %v1141 = vpow.pop %v1140
  %v1142 = vmul.f32 %v1087, 1.442695
  %v1143 = vpow.pop %v1142
  %v1144 = vmul.f32 %v1088, 1.442695
  %v1145 = vpow.pop %v1144
  %v1146 = vmul.f32 %v1089, 1.442695
  %v1147 = vpow.pop %v1146
  %v1148 = vmul.f32 %v1090, 1.442695
  %v1149 = vpow.pop %v1148
  %v1150 = vmul.f32 %v1091, 1.442695
  %v1151 = vpow.pop %v1150
  %v1152 = vmul.f32 %v1092, 1.442695
  %v1153 = vpow.pop %v1152
  %v1154 = vmul.f32 %v1093, 1.442695
  %v1155 = vpow.pop %v1154
  %v1156 = vmul.f32 %v1094, 1.442695
  %v1157 = vpow.pop %v1156
  %v1158 = vmul.f32 %v1095, 1.442695
  %v1159 = vpow.pop %v1158
  %1160 = vadd.xlane.f32.xlu0 %v1097
  %v1161 = vpop.xlane.xlu0 %1160
  %1162 = vadd.xlane.f32.xlu0 %v1099
  %v1163 = vpop.xlane.xlu0 %1162
  %1164 = vadd.xlane.f32.xlu0 %v1101
  %v1165 = vpop.xlane.xlu0 %1164
  %1166 = vadd.xlane.f32.xlu0 %v1103
  %v1167 = vpop.xlane.xlu0 %1166
  %1168 = vadd.xlane.f32.xlu0 %v1105
  %v1169 = vpop.xlane.xlu0 %1168
  %1170 = vadd.xlane.f32.xlu0 %v1107
  %v1171 = vpop.xlane.xlu0 %1170
  %1172 = vadd.xlane.f32.xlu0 %v1109
  %v1173 = vpop.xlane.xlu0 %1172
  %1174 = vadd.xlane.f32.xlu0 %v1111
  %v1175 = vpop.xlane.xlu0 %1174
  %1176 = vadd.xlane.f32.xlu0 %v1113
  %v1177 = vpop.xlane.xlu0 %1176
  %1178 = vadd.xlane.f32.xlu0 %v1115
  %v1179 = vpop.xlane.xlu0 %1178
  %1180 = vadd.xlane.f32.xlu0 %v1117
  %v1181 = vpop.xlane.xlu0 %1180
  %1182 = vadd.xlane.f32.xlu0 %v1119
  %v1183 = vpop.xlane.xlu0 %1182
  %1184 = vadd.xlane.f32.xlu0 %v1121
  %v1185 = vpop.xlane.xlu0 %1184
  %1186 = vadd.xlane.f32.xlu0 %v1123
  %v1187 = vpop.xlane.xlu0 %1186
  %1188 = vadd.xlane.f32.xlu0 %v1125
  %v1189 = vpop.xlane.xlu0 %1188
  %1190 = vadd.xlane.f32.xlu0 %v1127
  %v1191 = vpop.xlane.xlu0 %1190
  %1192 = vadd.xlane.f32.xlu0 %v1129
  %v1193 = vpop.xlane.xlu0 %1192
  %1194 = vadd.xlane.f32.xlu0 %v1131
  %v1195 = vpop.xlane.xlu0 %1194
  %1196 = vadd.xlane.f32.xlu0 %v1133
  %v1197 = vpop.xlane.xlu0 %1196
  %1198 = vadd.xlane.f32.xlu0 %v1135
  %v1199 = vpop.xlane.xlu0 %1198
  %1200 = vadd.xlane.f32.xlu0 %v1137
  %v1201 = vpop.xlane.xlu0 %1200
  %1202 = vadd.xlane.f32.xlu0 %v1139
  %v1203 = vpop.xlane.xlu0 %1202
  %1204 = vadd.xlane.f32.xlu0 %v1141
  %v1205 = vpop.xlane.xlu0 %1204
  %1206 = vadd.xlane.f32.xlu0 %v1143
  %v1207 = vpop.xlane.xlu0 %1206
  %1208 = vadd.xlane.f32.xlu0 %v1145
  %v1209 = vpop.xlane.xlu0 %1208
  %1210 = vadd.xlane.f32.xlu0 %v1147
  %v1211 = vpop.xlane.xlu0 %1210
  %1212 = vadd.xlane.f32.xlu0 %v1149
  %v1213 = vpop.xlane.xlu0 %1212
  %1214 = vadd.xlane.f32.xlu0 %v1151
  %v1215 = vpop.xlane.xlu0 %1214
  %1216 = vadd.xlane.f32.xlu0 %v1153
  %v1217 = vpop.xlane.xlu0 %1216
  %1218 = vadd.xlane.f32.xlu0 %v1155
  %v1219 = vpop.xlane.xlu0 %1218
  %1220 = vadd.xlane.f32.xlu0 %v1157
  %v1221 = vpop.xlane.xlu0 %1220
  %1222 = vadd.xlane.f32.xlu0 %v1159
  %v1223 = vpop.xlane.xlu0 %1222
  %v1224 = vrcp.pop %v1161
  %v1225 = vmul.f32 %v1097, %v1224
  %v1226 = vrcp.pop %v1163
  %v1227 = vmul.f32 %v1099, %v1226
  %v1228 = vrcp.pop %v1165
  %v1229 = vmul.f32 %v1101, %v1228
  %v1230 = vrcp.pop %v1167
  %v1231 = vmul.f32 %v1103, %v1230
  %v1232 = vrcp.pop %v1169
  %v1233 = vmul.f32 %v1105, %v1232
  %v1234 = vrcp.pop %v1171
  %v1235 = vmul.f32 %v1107, %v1234
  %v1236 = vrcp.pop %v1173
  %v1237 = vmul.f32 %v1109, %v1236
  %v1238 = vrcp.pop %v1175
  %v1239 = vmul.f32 %v1111, %v1238
  %v1240 = vrcp.pop %v1177
  %v1241 = vmul.f32 %v1113, %v1240
  %v1242 = vrcp.pop %v1179
  %v1243 = vmul.f32 %v1115, %v1242
  %v1244 = vrcp.pop %v1181
  %v1245 = vmul.f32 %v1117, %v1244
  %v1246 = vrcp.pop %v1183
  %v1247 = vmul.f32 %v1119, %v1246
  %v1248 = vrcp.pop %v1185
  %v1249 = vmul.f32 %v1121, %v1248
  %v1250 = vrcp.pop %v1187
  %v1251 = vmul.f32 %v1123, %v1250
  %v1252 = vrcp.pop %v1189
  %v1253 = vmul.f32 %v1125, %v1252
  %v1254 = vrcp.pop %v1191
  %v1255 = vmul.f32 %v1127, %v1254
  %v1256 = vrcp.pop %v1193
  %v1257 = vmul.f32 %v1129, %v1256
  %v1258 = vrcp.pop %v1195
  %v1259 = vmul.f32 %v1131, %v1258
  %v1260 = vrcp.pop %v1197
  %v1261 = vmul.f32 %v1133, %v1260
  %v1262 = vrcp.pop %v1199
  %v1263 = vmul.f32 %v1135, %v1262
  %v1264 = vrcp.pop %v1201
  %v1265 = vmul.f32 %v1137, %v1264
  %v1266 = vrcp.pop %v1203
  %v1267 = vmul.f32 %v1139, %v1266
  %v1268 = vrcp.pop %v1205
  %v1269 = vmul.f32 %v1141, %v1268
  %v1270 = vrcp.pop %v1207
  %v1271 = vmul.f32 %v1143, %v1270
  %v1272 = vrcp.pop %v1209
  %v1273 = vmul.f32 %v1145, %v1272
  %v1274 = vrcp.pop %v1211
  %v1275 = vmul.f32 %v1147, %v1274
  %v1276 = vrcp.pop %v1213
  %v1277 = vmul.f32 %v1149, %v1276
  %v1278 = vrcp.pop %v1215
  %v1279 = vmul.f32 %v1151, %v1278
  %v1280 = vrcp.pop %v1217
  %v1281 = vmul.f32 %v1153, %v1280
  %v1282 = vrcp.pop %v1219
  %v1283 = vmul.f32 %v1155, %v1282
  %v1284 = vrcp.pop %v1221
  %v1285 = vmul.f32 %v1157, %v1284
  %v1286 = vrcp.pop %v1223
  %v1287 = vmul.f32 %v1159, %v1286
  %1288 = vst [vmem:[%s7] sm:$0xff] %v1225
  %1289 = vst [vmem:[%s7 + $0x8] sm:$0xff] %v1227
  %1290 = vst [vmem:[%s7 + $0x10] sm:$0xff] %v1229
  %1291 = vst [vmem:[%s7 + $0x18] sm:$0xff] %v1231
  %1292 = vst [vmem:[%s7 + $0x20] sm:$0xff] %v1233
  %1293 = vst [vmem:[%s7 + $0x28] sm:$0xff] %v1235
  %1294 = vst [vmem:[%s7 + $0x30] sm:$0xff] %v1237
  %1295 = vst [vmem:[%s7 + $0x38] sm:$0xff] %v1239
  %1296 = vst [vmem:[%s7 + $0x40] sm:$0xff] %v1241
  %1297 = vst [vmem:[%s7 + $0x48] sm:$0xff] %v1243
  %1298 = vst [vmem:[%s7 + $0x50] sm:$0xff] %v1245
  %1299 = vst [vmem:[%s7 + $0x58] sm:$0xff] %v1247
  %1300 = vst [vmem:[%s7 + $0x60] sm:$0xff] %v1249
  %1301 = vst [vmem:[%s7 + $0x68] sm:$0xff] %v1251
  %1302 = vst [vmem:[%s7 + $0x70] sm:$0xff] %v1253
  %1303 = vst [vmem:[%s7 + $0x78] sm:$0xff] %v1255
  %1304 = vst [vmem:[%s7 + $0x80] sm:$0xff] %v1257
  %1305 = vst [vmem:[%s7 + $0x88] sm:$0xff] %v1259
  %1306 = vst [vmem:[%s7 + $0x90] sm:$0xff] %v1261
  %1307 = vst [vmem:[%s7 + $0x98] sm:$0xff] %v1263
  %1308 = vst [vmem:[%s7 + $0xa0] sm:$0xff] %v1265
  %1309 = vst [vmem:[%s7 + $0xa8] sm:$0xff] %v1267
  %1310 = vst [vmem:[%s7 + $0xb0] sm:$0xff] %v1269
  %1311 = vst [vmem:[%s7 + $0xb8] sm:$0xff] %v1271
  %1312 = vst [vmem:[%s7 + $0xc0] sm:$0xff] %v1273
  %1313 = vst [vmem:[%s7 + $0xc8] sm:$0xff] %v1275
  %1314 = vst [vmem:[%s7 + $0xd0] sm:$0xff] %v1277
  %1315 = vst [vmem:[%s7 + $0xd8] sm:$0xff] %v1279
  %1316 = vst [vmem:[%s7 + $0xe0] sm:$0xff] %v1281
  %1317 = vst [vmem:[%s7 + $0xe8] sm:$0xff] %v1283
  %1318 = vst [vmem:[%s7 + $0xf0] sm:$0xff] %v1285
  %1319 = vst [vmem:[%s7 + $0xf8] sm:$0xff] %v1287
  // Predicated region
  $region30: #{_forward_jit.1} parent=0 // pred_check
    _
  $region31: #{_forward_jit.1} parent=0 // pred_check_branch
    %1321 = sbr.rel (0) target = $region33
  $region32: #{_forward_jit.1} parent=0 // pred_region
    _
  $region33: #{_forward_jit.1} parent=0 // pred_fallthru
    _
  // Predicated region
  $region34: #{_forward_jit.1} parent=0 // pred_check
    _
  $region35: #{_forward_jit.1} parent=0 // pred_check_branch
    %1323 = sbr.rel (0) target = $region37
  $region36: #{_forward_jit.1} parent=0 // pred_region
    _
  $region37: #{_forward_jit.1} parent=0 // pred_fallthru
    _

</llo_original>
